<compile_context>
chip_gen: v7x
topology: tpu7x:2x2x1
jax: 0.10.0
libtpu: 0.0.40
codegen_flags: <defaults>
</compile_context>

<pallas_src>
import jax
import jax.numpy as jnp
from jax.experimental import pallas as pl
from jax.experimental.pallas import tpu as pltpu


_MAX_LANES = 1024   # cap on packed output width  G*E
_MAX_DEPTH = 256    # cap on packed contraction   G*K (one v6e/v7x MXU pass)


def _patch_embed_kernel(p_ref, w_ref, b_ref, o_ref):
    # (TR, G*K) @ (G*K, G*E) on the MXU, f32 accumulate, + f32 bias broadcast.
    acc = jnp.dot(p_ref[...], w_ref[...], preferred_element_type=jnp.float32)
    o_ref[...] = (acc + b_ref[...]).astype(o_ref.dtype)


def _spatial_packing(Hp, Wp, K, E):
    """(G, Gh, Gw): pack G = Gh*Gw *consecutive* patches per row, taken as Gw
    patches along W' (Gh > 1 only when Gw == Wp, i.e. whole W' rows).  This
    keeps the packed output a free row-major reshape of (M, E) and makes the
    gathered elements spatially contiguous in x."""
    for G in (32, 16, 8, 4, 2):
        if G * E > _MAX_LANES or G * K > _MAX_DEPTH:
            continue
        if Wp % G == 0:
            return G, 1, G
        if G % Wp == 0 and Hp % (G // Wp) == 0:
            return G, G // Wp, Wp
    return 1, 1, 1


def _flat_group(K, E):
    """Fallback packing factor along the flattened patch axis (rows padded)."""
    for G in (32, 16, 8, 4, 2):
        if G * E <= _MAX_LANES and G * K <= _MAX_DEPTH:
            return G
    return 1


def _min_grid_steps(rows):
    """v7x has 2 TensorCores: ask for >=4 parallel grid steps (>=2 per core)
    on non-tiny problems so each core still pipelines DMA against compute.
    v5e/v6e are single-core -> fewest, largest steps.  Tiny problems -> 1."""
    try:
        kind = jax.devices()[0].device_kind.lower()
    except Exception:
        kind = ""
    return 4 if ("v7" in kind and rows >= 512) else 1


def _pick_row_tile(rows, l_in, l_out, itemsize, min_steps):
    """Largest sublane-aligned divisor of `rows` whose double-buffered streamed
    VMEM footprint (LHS + output tiles) stays under ~10 MiB -- safe under the
    default scoped-VMEM limits of v5e/v6e/v7x together with the <=2 MiB
    double-buffered weight -- while honoring the per-generation minimum grid
    step count."""
    budget = 10 << 20
    bytes_per_row = 2 * (max(l_in, 128) + max(l_out, 128)) * itemsize
    cap = max(8, budget // bytes_per_row)
    target = max(8, min(rows, cap, rows // max(1, min_steps)))
    for t in range(target, 0, -1):
        if rows % t == 0 and (t % 8 == 0 or t == rows):
            return t
    return rows


def patch_embed_3d(x, weight, bias, patch_size, *, stream_dtype=None):
    """x: (N, C, D, H, W); weight: (E, C, p, p, p); bias: (E,).
    Returns (N, n_patches, E), matching PatchEmbed3D.forward
    (Conv3d with kernel_size == stride, flattened and transposed)."""
    N, C, D, H, W = x.shape
    p = patch_size
    E = weight.shape[0]
    Dp, Hp, Wp = D // p, H // p, W // p
    x = x[:, :, : Dp * p, : Hp * p, : Wp * p]   # Conv3d(stride=kernel) floors
    n_patches = Dp * Hp * Wp
    K = C * p * p * p
    M = N * n_patches

    dt = jnp.dtype(stream_dtype) if stream_dtype is not None else jnp.dtype(x.dtype)
    out_dtype = x.dtype

    G, Gh, Gw = _spatial_packing(Hp, Wp, K, E)
    pad_rows = 0
    if G * E >= 128:
        # Fast path: G consecutive patches per row (Gw along W', Gh along H').
        Hg, Wg = Hp // Gh, Wp // Gw
        rows = N * Dp * Hg * Wg                 # == M // G
        # Layout-only producer; allow_input_fusion lets XLA fuse it into the
        # Pallas input DMA.  Row content layout: (C, kd, jh, kh, jw, kw) so the
        # innermost gathered run is Gw*p (up to Gh*p*W) contiguous elements.
        xr = x.reshape(N, C, Dp, p, Hg, Gh, p, Wg, Gw, p)
        patches = xr.transpose(0, 2, 4, 7, 1, 3, 5, 6, 8, 9).reshape(rows, G * K)
        # w_big[(c,kd,a,kh,b,kw), (x,y,e)] = W[e,c,kd,kh,kw] * (x==a) * (y==b):
        # a row/column permutation of kron(I_G, W) matching the layouts above.
        wf = weight.reshape(E, C, p, p, p)
        w_big = jnp.einsum(
            "ecdhw,ax,by->cdahbwxye",
            wf, jnp.eye(Gh, dtype=wf.dtype), jnp.eye(Gw, dtype=wf.dtype),
        ).reshape(G * K, G * E)
    else:
        # Fallback: pack G patches from the flattened patch order, padding the
        # patch count so awkward M never falls back to masked (E<128) stores.
        G = _flat_group(K, E)
        pat = x.reshape(N, C, Dp, p, Hp, p, Wp, p)
        pat = pat.transpose(0, 2, 4, 6, 1, 3, 5, 7).reshape(M, K)
        m_pad = pl.cdiv(M, G) * G
        pad_rows = m_pad - M
        if pad_rows:
            pat = jnp.pad(pat, ((0, pad_rows), (0, 0)))
        rows = m_pad // G
        patches = pat.reshape(rows, G * K)
        w_big = jnp.kron(jnp.eye(G, dtype=weight.dtype),
                         weight.reshape(E, K).T)            # (G*K, G*E)

    L_in, L_out = G * K, G * E
    b_big = jnp.tile(bias, G).reshape(1, L_out).astype(jnp.float32)
    patches = patches.astype(dt)
    w_big = w_big.astype(dt)

    TR = _pick_row_tile(rows, L_in, L_out, dt.itemsize, _min_grid_steps(rows))
    grid = (rows // TR,)

    cost = pl.CostEstimate(
        flops=2 * rows * L_in * L_out,          # packed MXU work actually issued
        transcendentals=0,
        bytes_accessed=(rows * L_in + rows * L_out) * dt.itemsize
        + L_in * L_out * dt.itemsize + L_out * 4,
    )

    out_packed = pl.pallas_call(
        _patch_embed_kernel,
        out_shape=jax.ShapeDtypeStruct((rows, L_out), out_dtype),
        grid=grid,
        in_specs=[
            pl.BlockSpec((TR, L_in), lambda i: (i, 0)),
            pl.BlockSpec((L_in, L_out), lambda i: (0, 0)),
            pl.BlockSpec((1, L_out), lambda i: (0, 0)),
        ],
        out_specs=pl.BlockSpec((TR, L_out), lambda i: (i, 0)),
        compiler_params=pltpu.CompilerParams(
            dimension_semantics=("parallel",),
            allow_input_fusion=[True, False, False],
        ),
        cost_estimate=cost,
    )(patches, w_big, b_big)

    # Packed (rows, G*E) has exactly the same row-major bytes as (rows*G, E).
    out = out_packed.reshape(rows * G, E)
    if pad_rows:
        out = out[:M]
    return out.reshape(N, n_patches, E)


if __name__ == "__main__":
    # Small shapes consistent with the module: volume 16^3, patch 2, embed 32.
    N = 2
    img_size = (16, 16, 16)
    patch_size = 2
    embed_dim = 32
    in_chans = 1

    key = jax.random.PRNGKey(0)
    kx, kw, kb = jax.random.split(key, 3)

    x = jax.random.normal(kx, (N, in_chans, *img_size), dtype=jnp.float32)
    # Deterministic Conv3d-style init (uniform in +/- 1/sqrt(fan_in)).
    fan_in = in_chans * patch_size ** 3
    bound = 1.0 / (fan_in ** 0.5)
    weight = jax.random.uniform(
        kw, (embed_dim, in_chans, patch_size, patch_size, patch_size),
        minval=-bound, maxval=bound, dtype=jnp.float32)
    bias = jax.random.uniform(kb, (embed_dim,), minval=-bound, maxval=bound,
                              dtype=jnp.float32)

    # jit the wrapper so the layout-only patch producer lives in the same XLA
    # computation as the pallas_call and can fuse into its input DMA.
    fn = jax.jit(lambda xx, ww, bb: patch_embed_3d(xx, ww, bb, patch_size))
    out = jax.block_until_ready(fn(x, weight, bias))

    # Pure-JAX reference (same patch-matmul math as Conv3d with stride==kernel).
    p = patch_size
    Dp, Hp, Wp = (s // p for s in img_size)
    n_patches = Dp * Hp * Wp
    ref_patches = x.reshape(N, in_chans, Dp, p, Hp, p, Wp, p)
    ref_patches = ref_patches.transpose(0, 2, 4, 6, 1, 3, 5, 7).reshape(
        N, n_patches, in_chans * p ** 3)
    ref = jnp.einsum(
        "npk,ke->npe", ref_patches, weight.reshape(embed_dim, -1).T,
        precision=jax.lax.Precision.HIGHEST) + bias[None, None, :]

    assert out.shape == (N, n_patches, embed_dim)
    assert jnp.allclose(out, ref, atol=1e-4, rtol=1e-4)
    print("KERNEL_OK")
</pallas_src>

<mosaic_0001>
module attributes {stable_mosaic.version = 11 : i64} {
  func.func @_patch_embed_kernel(%arg0: i32, %arg1: memref<32x256xf32, #tpu.memory_space<vmem>>, %arg2: memref<256x1024xf32, #tpu.memory_space<vmem>>, %arg3: memref<1x1024xf32, #tpu.memory_space<vmem>>, %arg4: memref<32x1024xf32, #tpu.memory_space<vmem>>) attributes {dimension_semantics = [#tpu.dimension_semantics<parallel>], iteration_bounds = array<i64: 1>, scalar_prefetch = 0 : i64, scratch_operands = 0 : i64, tpu.core_type = #tpu.core_type<tc>, window_params = [{transform_indices = @transform_0, window_bounds = array<i64: 32, 256>}, {pipeline_mode = #tpu.pipeline_mode<synchronous>, transform_indices = @transform_1, window_bounds = array<i64: 256, 1024>}, {pipeline_mode = #tpu.pipeline_mode<synchronous>, transform_indices = @transform_2, window_bounds = array<i64: 1, 1024>}, {transform_indices = @transform_3, window_bounds = array<i64: 32, 1024>}]} {
    %c0 = arith.constant 0 : index
    %c0_0 = arith.constant 0 : index
    %0 = vector.load %arg1[%c0, %c0_0] : memref<32x256xf32, #tpu.memory_space<vmem>>, vector<32x256xf32>
    %c0_1 = arith.constant 0 : index
    %c0_2 = arith.constant 0 : index
    %1 = vector.load %arg2[%c0_1, %c0_2] : memref<256x1024xf32, #tpu.memory_space<vmem>>, vector<256x1024xf32>
    %cst = arith.constant dense<0.000000e+00> : vector<32x1024xf32>
    %2 = tpu.matmul %0, %1, %cst {dimension_numbers = #tpu.dot_dimension_numbers<[1], [0], [0], [1], [0, 0, 1, 1], [], []>} : vector<32x256xf32>, vector<256x1024xf32>, vector<32x1024xf32> -> vector<32x1024xf32>
    %c0_3 = arith.constant 0 : index
    %c0_4 = arith.constant 0 : index
    %3 = vector.load %arg3[%c0_3, %c0_4] : memref<1x1024xf32, #tpu.memory_space<vmem>>, vector<1x1024xf32>
    %4 = vector.broadcast %3 : vector<1x1024xf32> to vector<32x1024xf32>
    %5 = arith.addf %2, %4 : vector<32x1024xf32>
    %c0_5 = arith.constant 0 : index
    %c0_6 = arith.constant 0 : index
    %6 = vector.load %arg4[%c0_5, %c0_6] : memref<32x1024xf32, #tpu.memory_space<vmem>>, vector<32x1024xf32>
    tpu.vector_store %arg4[%c0_5, %c0_6], %5 {strides = array<i32>} : memref<32x1024xf32, #tpu.memory_space<vmem>>, vector<32x1024xf32>,
    return
  }
  func.func @transform_0(%arg0: i32) -> (i32, i32) {
    %c0_i32 = arith.constant 0 : i32
    %c0_i32_0 = arith.constant 0 : i32
    return %arg0, %c0_i32 : i32, i32
  }
  func.func @transform_1(%arg0: i32) -> (i32, i32) {
    %c0_i32 = arith.constant 0 : i32
    %c0_i32_0 = arith.constant 0 : i32
    %c0_i32_1 = arith.constant 0 : i32
    return %c0_i32, %c0_i32_0 : i32, i32
  }
  func.func @transform_2(%arg0: i32) -> (i32, i32) {
    %c0_i32 = arith.constant 0 : i32
    %c0_i32_0 = arith.constant 0 : i32
    %c0_i32_1 = arith.constant 0 : i32
    return %c0_i32, %c0_i32_0 : i32, i32
  }
  func.func @transform_3(%arg0: i32) -> (i32, i32) {
    %c0_i32 = arith.constant 0 : i32
    %c0_i32_0 = arith.constant 0 : i32
    return %arg0, %c0_i32 : i32, i32
  }
}

</mosaic_0001>

<llo_original>
// kernel: tile.8
$region0: #{tile.8}
  #allocation0 [shape = 's32[1]{0}', space=sflag, size = 0x4, scoped, tag = 'scoped memory for tile.8']
  %s0 = inlined_call_operand.vmem [shape: f32[32], index: 0, kind: input, shape index: {}]
  %s1 = inlined_call_operand.vmem [shape: f32[32,32], index: 1, kind: output, shape index: {}]
  // Predicated region
  $region2: #{tile.8} parent=0 // pred_check
    _
  $region3: #{tile.8} parent=0 // pred_check_branch
    %3 = sbr.rel (0) target = $region5
  $region4: #{tile.8} parent=0 // pred_region
    _
  $region5: #{tile.8} parent=0 // pred_fallthru
    _
  %v4 = vld [vmem:[%s0] ss:$0 sm:$0xff]
  %5 = vst [vmem:[%s1] sm:$0xff] %v4
  %s6 = scalar_lea.vmem %s1, 8
  %7 = vst [vmem:[%s6] sm:$0xff] %v4
  %s8 = scalar_lea.vmem %s1, 16
  %9 = vst [vmem:[%s8] sm:$0xff] %v4
  %s10 = scalar_lea.vmem %s1, 24
  %11 = vst [vmem:[%s10] sm:$0xff] %v4

// kernel: tile.9
$region0: #{tile.9}
  %s0 = inlined_call_operand.vmem [shape: f32[32,32], index: 0, kind: input, shape index: {}]
  %s1 = inlined_call_operand.vmem [shape: f32[1,1024], index: 1, kind: output, shape index: {}]
  $region1: #{tile.9} parent=0
    #allocation0 [shape = 'u8[32768]{0}', space=vmem, size = 0x8000, scoped, tag = 'scoped mem for output reshape']
    %v2 = vld [vmem:[%s0] ss:$4 sm:$0xff]
    %vm3 = vcmask 261120
    %4 = vst.msk [vmem:[#allocation0] ss:$8 sm:$0xf] %vm3, %v2
    %5 = vst.msk [vmem:[#allocation0] ss:$8 sm:$0xf0] %vm3, %v2
    %s6 = scalar_lea.vmem %s0, 3
    %v7 = vld [vmem:[%s6] ss:$4 sm:$0xff]
    %8 = vrot.lane.b32.xlu0 %v7, 96
    %v9 = vpop.permute.xlu0 %8
    %vm10 = vcmask 1048320
    %11 = vst.msk [vmem:[#allocation0] ss:$8 sm:$0xf] %vm10, %v9
    %12 = vst.msk [vmem:[#allocation0] ss:$8 sm:$0xf0] %vm10, %v9
    %s13 = scalar_lea.vmem %s0, 2
    %v14 = vld [vmem:[%s13] ss:$4 sm:$0xff]
    %15 = vrot.lane.b32.xlu0 %v14, 64
    %v16 = vpop.permute.xlu0 %15
    %vm17 = vcmask 785920
    %18 = vst.msk [vmem:[#allocation0] ss:$8 sm:$0xf] %vm17, %v16
    %19 = vst.msk [vmem:[#allocation0] ss:$8 sm:$0xf0] %vm17, %v16
    %s20 = scalar_lea.vmem %s0, 1
    %v21 = vld [vmem:[%s20] ss:$4 sm:$0xff]
    %22 = vrot.lane.b32.xlu0 %v21, 32
    %v23 = vpop.permute.xlu0 %22
    %vm24 = vcmask 523520
    %25 = vst.msk [vmem:[#allocation0] ss:$8 sm:$0xf] %vm24, %v23
    %26 = vst.msk [vmem:[#allocation0] ss:$8 sm:$0xf0] %vm24, %v23
    %s28 = sshllo.u32 0, 1
    %v30 = vld [vmem:[#allocation0] sm:%s28]
    %s31 = sshllo.u32 0, 1
    %32 = vst [vmem:[%s1] sm:%s31] %v30
    %s33 = scalar_lea.vmem [#allocation0], 8
    %v34 = vld [vmem:[%s33] sm:%s28]
    %s35 = sshllo.u32 0, 1
    %s36 = scalar_lea.vmem %s1, 1
    %37 = vst [vmem:[%s36] sm:%s35] %v34
    %s38 = scalar_lea.vmem [#allocation0], 16
    %v39 = vld [vmem:[%s38] sm:%s28]
    %s40 = sshllo.u32 0, 1
    %s41 = smul.addr 1, 2
    %s42 = scalar_lea.vmem %s1, %s41
    %43 = vst [vmem:[%s42] sm:%s40] %v39
    %s44 = scalar_lea.vmem [#allocation0], 24
    %v45 = vld [vmem:[%s44] sm:%s28]
    %s46 = sshllo.u32 0, 1
    %s47 = smul.addr 1, 3
    %s48 = scalar_lea.vmem %s1, %s47
    %49 = vst [vmem:[%s48] sm:%s46] %v45
    %s50 = scalar_lea.vmem [#allocation0], 32
    %v51 = vld [vmem:[%s50] sm:%s28]
    %s52 = sshllo.u32 0, 1
    %s53 = smul.addr 1, 4
    %s54 = scalar_lea.vmem %s1, %s53
    %55 = vst [vmem:[%s54] sm:%s52] %v51
    %s56 = scalar_lea.vmem [#allocation0], 40
    %v57 = vld [vmem:[%s56] sm:%s28]
    %s58 = sshllo.u32 0, 1
    %s59 = smul.addr 1, 5
    %s60 = scalar_lea.vmem %s1, %s59
    %61 = vst [vmem:[%s60] sm:%s58] %v57
    %s62 = scalar_lea.vmem [#allocation0], 48
    %v63 = vld [vmem:[%s62] sm:%s28]
    %s64 = sshllo.u32 0, 1
    %s65 = smul.addr 1, 6
    %s66 = scalar_lea.vmem %s1, %s65
    %67 = vst [vmem:[%s66] sm:%s64] %v63
    %s68 = scalar_lea.vmem [#allocation0], 56
    %v69 = vld [vmem:[%s68] sm:%s28]
    %s70 = sshllo.u32 0, 1
    %s71 = smul.addr 1, 7
    %s72 = scalar_lea.vmem %s1, %s71
    %73 = vst [vmem:[%s72] sm:%s70] %v69

// kernel: _lambda_.1
$region0: #{_lambda_.1}
  #allocation0 [shape = 'u32[]', space=smem, size = 0x4, offset = 0x4, fixed_abs, tag = 'smem constant byte address 0x4 - core index']
  #allocation1 [shape = 'u32[144,128]{1,0:T(1,128)}', space=vmem, size = 0x12000, scoped, tag = 'internal scratch']
  %s0 = inlined_call_operand.vmem [shape: f32[32,256], index: 0, kind: input, shape index: {}]
  %s1 = inlined_call_operand.vmem [shape: f32[256,1024], index: 1, kind: input, shape index: {}]
  %s2 = inlined_call_operand.vmem [shape: f32[1,1024], index: 2, kind: input, shape index: {}]
  %s3 = inlined_call_operand.vmem [shape: f32[32,1024], index: 3, kind: output, shape index: {}]
  %s4 = sld [smem:[#allocation0]]
  $region22: #{_lambda_.1} parent=0
    _
  %s6 = ssub.s32 1, %s4
  %s7 = scalar_select 0, %s6, %s4
  // Predicated region
  $region2: #{_lambda_.1} parent=0 // pred_check
    _
  $region3: #{_lambda_.1} parent=0 // pred_check_branch
    %9 = sbr.rel (0) target = $region5
  $region4: #{_lambda_.1} parent=0 // pred_region
    _
  $region5: #{_lambda_.1} parent=0 // pred_fallthru
    _
  // Predicated region
  $region6: #{_lambda_.1} parent=0 // pred_check
    _
  $region7: #{_lambda_.1} parent=0 // pred_check_branch
    %11 = sbr.rel (0) target = $region9
  $region8: #{_lambda_.1} parent=0 // pred_region
    _
  $region9: #{_lambda_.1} parent=0 // pred_fallthru
    _
  // Predicated region
  $region10: #{_lambda_.1} parent=0 // pred_check
    _
  $region11: #{_lambda_.1} parent=0 // pred_check_branch
    %13 = sbr.rel (0) target = $region13
  $region12: #{_lambda_.1} parent=0 // pred_region
    _
  $region13: #{_lambda_.1} parent=0 // pred_fallthru
    _
  %v14 = vld [vmem:[%s0] sm:$0xff]
  %v15 = vld [vmem:[%s0 + $0x8] sm:$0xff]
  %v16 = vld [vmem:[%s0 + $0x10] sm:$0xff]
  %v17 = vld [vmem:[%s0 + $0x18] sm:$0xff]
  %v18 = vld [vmem:[%s0 + $0x20] sm:$0xff]
  %v19 = vld [vmem:[%s0 + $0x28] sm:$0xff]
  %v20 = vld [vmem:[%s0 + $0x30] sm:$0xff]
  %v21 = vld [vmem:[%s0 + $0x38] sm:$0xff]
  %v22 = vld [vmem:[%s1] sm:$0xff]
  %v23 = vld [vmem:[%s1 + $0x8] sm:$0xff]
  %v24 = vld [vmem:[%s1 + $0x10] sm:$0xff]
  %v25 = vld [vmem:[%s1 + $0x18] sm:$0xff]
  %v26 = vld [vmem:[%s1 + $0x20] sm:$0xff]
  %v27 = vld [vmem:[%s1 + $0x28] sm:$0xff]
  %v28 = vld [vmem:[%s1 + $0x30] sm:$0xff]
  %v29 = vld [vmem:[%s1 + $0x38] sm:$0xff]
  %v30 = vld [vmem:[%s1 + $0x40] sm:$0xff]
  %v31 = vld [vmem:[%s1 + $0x48] sm:$0xff]
  %v32 = vld [vmem:[%s1 + $0x50] sm:$0xff]
  %v33 = vld [vmem:[%s1 + $0x58] sm:$0xff]
  %v34 = vld [vmem:[%s1 + $0x60] sm:$0xff]
  %v35 = vld [vmem:[%s1 + $0x68] sm:$0xff]
  %v36 = vld [vmem:[%s1 + $0x70] sm:$0xff]
  %v37 = vld [vmem:[%s1 + $0x78] sm:$0xff]
  %v38 = vld [vmem:[%s1 + $0x80] sm:$0xff]
  %v39 = vld [vmem:[%s1 + $0x88] sm:$0xff]
  %v40 = vld [vmem:[%s1 + $0x90] sm:$0xff]
  %v41 = vld [vmem:[%s1 + $0x98] sm:$0xff]
  %v42 = vld [vmem:[%s1 + $0xa0] sm:$0xff]
  %v43 = vld [vmem:[%s1 + $0xa8] sm:$0xff]
  %v44 = vld [vmem:[%s1 + $0xb0] sm:$0xff]
  %v45 = vld [vmem:[%s1 + $0xb8] sm:$0xff]
  %v46 = vld [vmem:[%s1 + $0xc0] sm:$0xff]
  %v47 = vld [vmem:[%s1 + $0xc8] sm:$0xff]
  %v48 = vld [vmem:[%s1 + $0xd0] sm:$0xff]
  %v49 = vld [vmem:[%s1 + $0xd8] sm:$0xff]
  %v50 = vld [vmem:[%s1 + $0xe0] sm:$0xff]
  %v51 = vld [vmem:[%s1 + $0xe8] sm:$0xff]
  %v52 = vld [vmem:[%s1 + $0xf0] sm:$0xff]
  %v53 = vld [vmem:[%s1 + $0xf8] sm:$0xff]
  %v54 = vld [vmem:[%s1 + $0x100] sm:$0xff]
  %v55 = vld [vmem:[%s1 + $0x108] sm:$0xff]
  %v56 = vld [vmem:[%s1 + $0x110] sm:$0xff]
  %v57 = vld [vmem:[%s1 + $0x118] sm:$0xff]
  %v58 = vld [vmem:[%s1 + $0x120] sm:$0xff]
  %v59 = vld [vmem:[%s1 + $0x128] sm:$0xff]
  %v60 = vld [vmem:[%s1 + $0x130] sm:$0xff]
  %v61 = vld [vmem:[%s1 + $0x138] sm:$0xff]
  %v62 = vld [vmem:[%s1 + $0x140] sm:$0xff]
  %v63 = vld [vmem:[%s1 + $0x148] sm:$0xff]
  %v64 = vld [vmem:[%s1 + $0x150] sm:$0xff]
  %v65 = vld [vmem:[%s1 + $0x158] sm:$0xff]
  %v66 = vld [vmem:[%s1 + $0x160] sm:$0xff]
  %v67 = vld [vmem:[%s1 + $0x168] sm:$0xff]
  %v68 = vld [vmem:[%s1 + $0x170] sm:$0xff]
  %v69 = vld [vmem:[%s1 + $0x178] sm:$0xff]
  %v70 = vld [vmem:[%s1 + $0x180] sm:$0xff]
  %v71 = vld [vmem:[%s1 + $0x188] sm:$0xff]
  %v72 = vld [vmem:[%s1 + $0x190] sm:$0xff]
  %v73 = vld [vmem:[%s1 + $0x198] sm:$0xff]
  %v74 = vld [vmem:[%s1 + $0x1a0] sm:$0xff]
  %v75 = vld [vmem:[%s1 + $0x1a8] sm:$0xff]
  %v76 = vld [vmem:[%s1 + $0x1b0] sm:$0xff]
  %v77 = vld [vmem:[%s1 + $0x1b8] sm:$0xff]
  %v78 = vld [vmem:[%s1 + $0x1c0] sm:$0xff]
  %v79 = vld [vmem:[%s1 + $0x1c8] sm:$0xff]
  %v80 = vld [vmem:[%s1 + $0x1d0] sm:$0xff]
  %v81 = vld [vmem:[%s1 + $0x1d8] sm:$0xff]
  %v82 = vld [vmem:[%s1 + $0x1e0] sm:$0xff]
  %v83 = vld [vmem:[%s1 + $0x1e8] sm:$0xff]
  %v84 = vld [vmem:[%s1 + $0x1f0] sm:$0xff]
  %v85 = vld [vmem:[%s1 + $0x1f8] sm:$0xff]
  %v86 = vld [vmem:[%s1 + $0x200] sm:$0xff]
  %v87 = vld [vmem:[%s1 + $0x208] sm:$0xff]
  %v88 = vld [vmem:[%s1 + $0x210] sm:$0xff]
  %v89 = vld [vmem:[%s1 + $0x218] sm:$0xff]
  %v90 = vld [vmem:[%s1 + $0x220] sm:$0xff]
  %v91 = vld [vmem:[%s1 + $0x228] sm:$0xff]
  %v92 = vld [vmem:[%s1 + $0x230] sm:$0xff]
  %v93 = vld [vmem:[%s1 + $0x238] sm:$0xff]
  %v94 = vld [vmem:[%s1 + $0x240] sm:$0xff]
  %v95 = vld [vmem:[%s1 + $0x248] sm:$0xff]
  %v96 = vld [vmem:[%s1 + $0x250] sm:$0xff]
  %v97 = vld [vmem:[%s1 + $0x258] sm:$0xff]
  %v98 = vld [vmem:[%s1 + $0x260] sm:$0xff]
  %v99 = vld [vmem:[%s1 + $0x268] sm:$0xff]
  %v100 = vld [vmem:[%s1 + $0x270] sm:$0xff]
  %v101 = vld [vmem:[%s1 + $0x278] sm:$0xff]
  %v102 = vld [vmem:[%s1 + $0x280] sm:$0xff]
  %v103 = vld [vmem:[%s1 + $0x288] sm:$0xff]
  %v104 = vld [vmem:[%s1 + $0x290] sm:$0xff]
  %v105 = vld [vmem:[%s1 + $0x298] sm:$0xff]
  %v106 = vld [vmem:[%s1 + $0x2a0] sm:$0xff]
  %v107 = vld [vmem:[%s1 + $0x2a8] sm:$0xff]
  %v108 = vld [vmem:[%s1 + $0x2b0] sm:$0xff]
  %v109 = vld [vmem:[%s1 + $0x2b8] sm:$0xff]
  %v110 = vld [vmem:[%s1 + $0x2c0] sm:$0xff]
  %v111 = vld [vmem:[%s1 + $0x2c8] sm:$0xff]
  %v112 = vld [vmem:[%s1 + $0x2d0] sm:$0xff]
  %v113 = vld [vmem:[%s1 + $0x2d8] sm:$0xff]
  %v114 = vld [vmem:[%s1 + $0x2e0] sm:$0xff]
  %v115 = vld [vmem:[%s1 + $0x2e8] sm:$0xff]
  %v116 = vld [vmem:[%s1 + $0x2f0] sm:$0xff]
  %v117 = vld [vmem:[%s1 + $0x2f8] sm:$0xff]
  %v118 = vld [vmem:[%s1 + $0x300] sm:$0xff]
  %v119 = vld [vmem:[%s1 + $0x308] sm:$0xff]
  %v120 = vld [vmem:[%s1 + $0x310] sm:$0xff]
  %v121 = vld [vmem:[%s1 + $0x318] sm:$0xff]
  %v122 = vld [vmem:[%s1 + $0x320] sm:$0xff]
  %v123 = vld [vmem:[%s1 + $0x328] sm:$0xff]
  %v124 = vld [vmem:[%s1 + $0x330] sm:$0xff]
  %v125 = vld [vmem:[%s1 + $0x338] sm:$0xff]
  %v126 = vld [vmem:[%s1 + $0x340] sm:$0xff]
  %v127 = vld [vmem:[%s1 + $0x348] sm:$0xff]
  %v128 = vld [vmem:[%s1 + $0x350] sm:$0xff]
  %v129 = vld [vmem:[%s1 + $0x358] sm:$0xff]
  %v130 = vld [vmem:[%s1 + $0x360] sm:$0xff]
  %v131 = vld [vmem:[%s1 + $0x368] sm:$0xff]
  %v132 = vld [vmem:[%s1 + $0x370] sm:$0xff]
  %v133 = vld [vmem:[%s1 + $0x378] sm:$0xff]
  %v134 = vld [vmem:[%s1 + $0x380] sm:$0xff]
  %v135 = vld [vmem:[%s1 + $0x388] sm:$0xff]
  %v136 = vld [vmem:[%s1 + $0x390] sm:$0xff]
  %v137 = vld [vmem:[%s1 + $0x398] sm:$0xff]
  %v138 = vld [vmem:[%s1 + $0x3a0] sm:$0xff]
  %v139 = vld [vmem:[%s1 + $0x3a8] sm:$0xff]
  %v140 = vld [vmem:[%s1 + $0x3b0] sm:$0xff]
  %v141 = vld [vmem:[%s1 + $0x3b8] sm:$0xff]
  %v142 = vld [vmem:[%s1 + $0x3c0] sm:$0xff]
  %v143 = vld [vmem:[%s1 + $0x3c8] sm:$0xff]
  %v144 = vld [vmem:[%s1 + $0x3d0] sm:$0xff]
  %v145 = vld [vmem:[%s1 + $0x3d8] sm:$0xff]
  %v146 = vld [vmem:[%s1 + $0x3e0] sm:$0xff]
  %v147 = vld [vmem:[%s1 + $0x3e8] sm:$0xff]
  %v148 = vld [vmem:[%s1 + $0x3f0] sm:$0xff]
  %v149 = vld [vmem:[%s1 + $0x3f8] sm:$0xff]
  %v150 = vld [vmem:[%s1 + $0x400] sm:$0xff]
  %v151 = vld [vmem:[%s1 + $0x408] sm:$0xff]
  %v152 = vld [vmem:[%s1 + $0x410] sm:$0xff]
  %v153 = vld [vmem:[%s1 + $0x418] sm:$0xff]
  %v154 = vld [vmem:[%s1 + $0x420] sm:$0xff]
  %v155 = vld [vmem:[%s1 + $0x428] sm:$0xff]
  %v156 = vld [vmem:[%s1 + $0x430] sm:$0xff]
  %v157 = vld [vmem:[%s1 + $0x438] sm:$0xff]
  %v158 = vld [vmem:[%s1 + $0x440] sm:$0xff]
  %v159 = vld [vmem:[%s1 + $0x448] sm:$0xff]
  %v160 = vld [vmem:[%s1 + $0x450] sm:$0xff]
  %v161 = vld [vmem:[%s1 + $0x458] sm:$0xff]
  %v162 = vld [vmem:[%s1 + $0x460] sm:$0xff]
  %v163 = vld [vmem:[%s1 + $0x468] sm:$0xff]
  %v164 = vld [vmem:[%s1 + $0x470] sm:$0xff]
  %v165 = vld [vmem:[%s1 + $0x478] sm:$0xff]
  %v166 = vld [vmem:[%s1 + $0x480] sm:$0xff]
  %v167 = vld [vmem:[%s1 + $0x488] sm:$0xff]
  %v168 = vld [vmem:[%s1 + $0x490] sm:$0xff]
  %v169 = vld [vmem:[%s1 + $0x498] sm:$0xff]
  %v170 = vld [vmem:[%s1 + $0x4a0] sm:$0xff]
  %v171 = vld [vmem:[%s1 + $0x4a8] sm:$0xff]
  %v172 = vld [vmem:[%s1 + $0x4b0] sm:$0xff]
  %v173 = vld [vmem:[%s1 + $0x4b8] sm:$0xff]
  %v174 = vld [vmem:[%s1 + $0x4c0] sm:$0xff]
  %v175 = vld [vmem:[%s1 + $0x4c8] sm:$0xff]
  %v176 = vld [vmem:[%s1 + $0x4d0] sm:$0xff]
  %v177 = vld [vmem:[%s1 + $0x4d8] sm:$0xff]
  %v178 = vld [vmem:[%s1 + $0x4e0] sm:$0xff]
  %v179 = vld [vmem:[%s1 + $0x4e8] sm:$0xff]
  %v180 = vld [vmem:[%s1 + $0x4f0] sm:$0xff]
  %v181 = vld [vmem:[%s1 + $0x4f8] sm:$0xff]
  %v182 = vld [vmem:[%s1 + $0x500] sm:$0xff]
  %v183 = vld [vmem:[%s1 + $0x508] sm:$0xff]
  %v184 = vld [vmem:[%s1 + $0x510] sm:$0xff]
  %v185 = vld [vmem:[%s1 + $0x518] sm:$0xff]
  %v186 = vld [vmem:[%s1 + $0x520] sm:$0xff]
  %v187 = vld [vmem:[%s1 + $0x528] sm:$0xff]
  %v188 = vld [vmem:[%s1 + $0x530] sm:$0xff]
  %v189 = vld [vmem:[%s1 + $0x538] sm:$0xff]
  %v190 = vld [vmem:[%s1 + $0x540] sm:$0xff]
  %v191 = vld [vmem:[%s1 + $0x548] sm:$0xff]
  %v192 = vld [vmem:[%s1 + $0x550] sm:$0xff]
  %v193 = vld [vmem:[%s1 + $0x558] sm:$0xff]
  %v194 = vld [vmem:[%s1 + $0x560] sm:$0xff]
  %v195 = vld [vmem:[%s1 + $0x568] sm:$0xff]
  %v196 = vld [vmem:[%s1 + $0x570] sm:$0xff]
  %v197 = vld [vmem:[%s1 + $0x578] sm:$0xff]
  %v198 = vld [vmem:[%s1 + $0x580] sm:$0xff]
  %v199 = vld [vmem:[%s1 + $0x588] sm:$0xff]
  %v200 = vld [vmem:[%s1 + $0x590] sm:$0xff]
  %v201 = vld [vmem:[%s1 + $0x598] sm:$0xff]
  %v202 = vld [vmem:[%s1 + $0x5a0] sm:$0xff]
  %v203 = vld [vmem:[%s1 + $0x5a8] sm:$0xff]
  %v204 = vld [vmem:[%s1 + $0x5b0] sm:$0xff]
  %v205 = vld [vmem:[%s1 + $0x5b8] sm:$0xff]
  %v206 = vld [vmem:[%s1 + $0x5c0] sm:$0xff]
  %v207 = vld [vmem:[%s1 + $0x5c8] sm:$0xff]
  %v208 = vld [vmem:[%s1 + $0x5d0] sm:$0xff]
  %v209 = vld [vmem:[%s1 + $0x5d8] sm:$0xff]
  %v210 = vld [vmem:[%s1 + $0x5e0] sm:$0xff]
  %v211 = vld [vmem:[%s1 + $0x5e8] sm:$0xff]
  %v212 = vld [vmem:[%s1 + $0x5f0] sm:$0xff]
  %v213 = vld [vmem:[%s1 + $0x5f8] sm:$0xff]
  %v214 = vld [vmem:[%s1 + $0x600] sm:$0xff]
  %v215 = vld [vmem:[%s1 + $0x608] sm:$0xff]
  %v216 = vld [vmem:[%s1 + $0x610] sm:$0xff]
  %v217 = vld [vmem:[%s1 + $0x618] sm:$0xff]
  %v218 = vld [vmem:[%s1 + $0x620] sm:$0xff]
  %v219 = vld [vmem:[%s1 + $0x628] sm:$0xff]
  %v220 = vld [vmem:[%s1 + $0x630] sm:$0xff]
  %v221 = vld [vmem:[%s1 + $0x638] sm:$0xff]
  %v222 = vld [vmem:[%s1 + $0x640] sm:$0xff]
  %v223 = vld [vmem:[%s1 + $0x648] sm:$0xff]
  %v224 = vld [vmem:[%s1 + $0x650] sm:$0xff]
  %v225 = vld [vmem:[%s1 + $0x658] sm:$0xff]
  %v226 = vld [vmem:[%s1 + $0x660] sm:$0xff]
  %v227 = vld [vmem:[%s1 + $0x668] sm:$0xff]
  %v228 = vld [vmem:[%s1 + $0x670] sm:$0xff]
  %v229 = vld [vmem:[%s1 + $0x678] sm:$0xff]
  %v230 = vld [vmem:[%s1 + $0x680] sm:$0xff]
  %v231 = vld [vmem:[%s1 + $0x688] sm:$0xff]
  %v232 = vld [vmem:[%s1 + $0x690] sm:$0xff]
  %v233 = vld [vmem:[%s1 + $0x698] sm:$0xff]
  %v234 = vld [vmem:[%s1 + $0x6a0] sm:$0xff]
  %v235 = vld [vmem:[%s1 + $0x6a8] sm:$0xff]
  %v236 = vld [vmem:[%s1 + $0x6b0] sm:$0xff]
  %v237 = vld [vmem:[%s1 + $0x6b8] sm:$0xff]
  %v238 = vld [vmem:[%s1 + $0x6c0] sm:$0xff]
  %v239 = vld [vmem:[%s1 + $0x6c8] sm:$0xff]
  %v240 = vld [vmem:[%s1 + $0x6d0] sm:$0xff]
  %v241 = vld [vmem:[%s1 + $0x6d8] sm:$0xff]
  %v242 = vld [vmem:[%s1 + $0x6e0] sm:$0xff]
  %v243 = vld [vmem:[%s1 + $0x6e8] sm:$0xff]
  %v244 = vld [vmem:[%s1 + $0x6f0] sm:$0xff]
  %v245 = vld [vmem:[%s1 + $0x6f8] sm:$0xff]
  %v246 = vld [vmem:[%s1 + $0x700] sm:$0xff]
  %v247 = vld [vmem:[%s1 + $0x708] sm:$0xff]
  %v248 = vld [vmem:[%s1 + $0x710] sm:$0xff]
  %v249 = vld [vmem:[%s1 + $0x718] sm:$0xff]
  %v250 = vld [vmem:[%s1 + $0x720] sm:$0xff]
  %v251 = vld [vmem:[%s1 + $0x728] sm:$0xff]
  %v252 = vld [vmem:[%s1 + $0x730] sm:$0xff]
  %v253 = vld [vmem:[%s1 + $0x738] sm:$0xff]
  %v254 = vld [vmem:[%s1 + $0x740] sm:$0xff]
  %v255 = vld [vmem:[%s1 + $0x748] sm:$0xff]
  %v256 = vld [vmem:[%s1 + $0x750] sm:$0xff]
  %v257 = vld [vmem:[%s1 + $0x758] sm:$0xff]
  %v258 = vld [vmem:[%s1 + $0x760] sm:$0xff]
  %v259 = vld [vmem:[%s1 + $0x768] sm:$0xff]
  %v260 = vld [vmem:[%s1 + $0x770] sm:$0xff]
  %v261 = vld [vmem:[%s1 + $0x778] sm:$0xff]
  %v262 = vld [vmem:[%s1 + $0x780] sm:$0xff]
  %v263 = vld [vmem:[%s1 + $0x788] sm:$0xff]
  %v264 = vld [vmem:[%s1 + $0x790] sm:$0xff]
  %v265 = vld [vmem:[%s1 + $0x798] sm:$0xff]
  %v266 = vld [vmem:[%s1 + $0x7a0] sm:$0xff]
  %v267 = vld [vmem:[%s1 + $0x7a8] sm:$0xff]
  %v268 = vld [vmem:[%s1 + $0x7b0] sm:$0xff]
  %v269 = vld [vmem:[%s1 + $0x7b8] sm:$0xff]
  %v270 = vld [vmem:[%s1 + $0x7c0] sm:$0xff]
  %v271 = vld [vmem:[%s1 + $0x7c8] sm:$0xff]
  %v272 = vld [vmem:[%s1 + $0x7d0] sm:$0xff]
  %v273 = vld [vmem:[%s1 + $0x7d8] sm:$0xff]
  %v274 = vld [vmem:[%s1 + $0x7e0] sm:$0xff]
  %v275 = vld [vmem:[%s1 + $0x7e8] sm:$0xff]
  %v276 = vld [vmem:[%s1 + $0x7f0] sm:$0xff]
  %v277 = vld [vmem:[%s1 + $0x7f8] sm:$0xff]
  %v278 = vld [vmem:[%s2] sm:$0xff]
  %v280 = vlaneseq
  %v281 = vshrl.u32 %v280, 7
  %v282 = vsub.s32 0, %v281
  %v283 = vrot.slane %v278, %v282
  %v284 = vlaneseq
  %v285 = vshrl.u32 %v284, 7
  %v286 = vsub.s32 1, %v285
  %v287 = vrot.slane %v278, %v286
  %v288 = vlaneseq
  %v289 = vshrl.u32 %v288, 7
  %v290 = vsub.s32 2, %v289
  %v291 = vrot.slane %v278, %v290
  %v292 = vlaneseq
  %v293 = vshrl.u32 %v292, 7
  %v294 = vsub.s32 3, %v293
  %v295 = vrot.slane %v278, %v294
  %v296 = vlaneseq
  %v297 = vshrl.u32 %v296, 7
  %v298 = vsub.s32 4, %v297
  %v299 = vrot.slane %v278, %v298
  %v300 = vlaneseq
  %v301 = vshrl.u32 %v300, 7
  %v302 = vsub.s32 5, %v301
  %v303 = vrot.slane %v278, %v302
  %v304 = vlaneseq
  %v305 = vshrl.u32 %v304, 7
  %v306 = vsub.s32 6, %v305
  %v307 = vrot.slane %v278, %v306
  %v308 = vlaneseq
  %v309 = vshrl.u32 %v308, 7
  %v310 = vsub.s32 7, %v309
  %v311 = vrot.slane %v278, %v310
  %320 = vmatprep.subr.mxu0 %v23
  %321 = vmatpush1.msra.mxu0 %v22
  %322 = vmatprep.subr.mxu0 %v31
  %323 = vmatpush1.msra.mxu0 %v30
  %324 = vmatprep.subr.mxu0 %v39
  %325 = vmatpush1.msra.mxu0 %v38
  %326 = vmatprep.subr.mxu0 %v47
  %327 = vmatpush1.msra.mxu0 %v46
  %328 = vmatprep.subr.mxu0 %v55
  %329 = vmatpush1.msra.mxu0 %v54
  %330 = vmatprep.subr.mxu0 %v63
  %331 = vmatpush1.msra.mxu0 %v62
  %332 = vmatprep.subr.mxu0 %v71
  %333 = vmatpush1.msra.mxu0 %v70
  %334 = vmatprep.subr.mxu0 %v79
  %335 = vmatpush1.msra.mxu0 %v78
  %336 = vmatprep.subr.mxu0 %v87
  %337 = vmatpush1.msra.mxu0 %v86
  %338 = vmatprep.subr.mxu0 %v95
  %339 = vmatpush1.msra.mxu0 %v94
  %340 = vmatprep.subr.mxu0 %v103
  %341 = vmatpush1.msra.mxu0 %v102
  %342 = vmatprep.subr.mxu0 %v111
  %343 = vmatpush1.msra.mxu0 %v110
  %344 = vmatprep.subr.mxu0 %v119
  %345 = vmatpush1.msra.mxu0 %v118
  %346 = vmatprep.subr.mxu0 %v127
  %347 = vmatpush1.msra.mxu0 %v126
  %348 = vmatprep.subr.mxu0 %v135
  %349 = vmatpush1.msra.mxu0 %v134
  %350 = vmatprep.subr.mxu0 %v143
  %351 = vmatpush1.msra.mxu0 %v142
  %352 = vmatprep.subr.mxu0 %v151
  %353 = vmatpush1.msra.mxu0 %v150
  %354 = vmatprep.subr.mxu0 %v159
  %355 = vmatpush1.msra.mxu0 %v158
  %356 = vmatprep.subr.mxu0 %v167
  %357 = vmatpush1.msra.mxu0 %v166
  %358 = vmatprep.subr.mxu0 %v175
  %359 = vmatpush1.msra.mxu0 %v174
  %360 = vmatprep.subr.mxu0 %v183
  %361 = vmatpush1.msra.mxu0 %v182
  %362 = vmatprep.subr.mxu0 %v191
  %363 = vmatpush1.msra.mxu0 %v190
  %364 = vmatprep.subr.mxu0 %v199
  %365 = vmatpush1.msra.mxu0 %v198
  %366 = vmatprep.subr.mxu0 %v207
  %367 = vmatpush1.msra.mxu0 %v206
  %368 = vmatprep.subr.mxu0 %v215
  %369 = vmatpush1.msra.mxu0 %v214
  %370 = vmatprep.subr.mxu0 %v223
  %371 = vmatpush1.msra.mxu0 %v222
  %372 = vmatprep.subr.mxu0 %v231
  %373 = vmatpush1.msra.mxu0 %v230
  %374 = vmatprep.subr.mxu0 %v239
  %375 = vmatpush1.msra.mxu0 %v238
  %376 = vmatprep.subr.mxu0 %v247
  %377 = vmatpush1.msra.mxu0 %v246
  %378 = vmatprep.subr.mxu0 %v255
  %379 = vmatpush1.msra.mxu0 %v254
  %380 = vmatprep.subr.mxu0 %v263
  %381 = vmatpush1.msra.mxu0 %v262
  %382 = vmatprep.subr.mxu0 %v271
  %383 = vmatpush1.msra.mxu0 %v270
  %384 = vmatprep.mubr.f32.mxu0 %v15
  %385 = vmatmul.mubr.f32.gmra.mrb[0].mxu0 %v14
  %v386 = vpop.f32.mrb[0].mxu0
  %v387 = vadd.f32 %v283, %v386
  %v388 = vpop.f32.mrb[0].mxu0
  %v389 = vadd.f32 %v287, %v388
  %390 = vmatprep.mubr.f32.mxu0 %v17
  %391 = vmatmul.mubr.f32.gmra.mrb[0].mxu0 %v16
  %v392 = vpop.f32.mrb[0].mxu0
  %v393 = vadd.f32 %v283, %v392
  %v394 = vpop.f32.mrb[0].mxu0
  %v395 = vadd.f32 %v287, %v394
  %396 = vmatprep.mubr.f32.mxu0 %v19
  %397 = vmatmul.mubr.f32.gmra.mrb[0].mxu0 %v18
  %v398 = vpop.f32.mrb[0].mxu0
  %v399 = vadd.f32 %v283, %v398
  %v400 = vpop.f32.mrb[0].mxu0
  %v401 = vadd.f32 %v287, %v400
  %402 = vmatprep.mubr.f32.mxu0 %v21
  %403 = vmatmul.mubr.f32.gmra.mrb[0].mxu0 %v20
  %v404 = vpop.f32.mrb[0].mxu0
  %v405 = vadd.f32 %v283, %v404
  %v406 = vpop.f32.mrb[0].mxu0
  %v407 = vadd.f32 %v287, %v406
  %408 = vdwg.mxu0
  %409 = vmatprep.subr.mxu0 %v25
  %410 = vmatpush1.msra.mxu0 %v24
  %411 = vmatprep.subr.mxu0 %v33
  %412 = vmatpush1.msra.mxu0 %v32
  %413 = vmatprep.subr.mxu0 %v41
  %414 = vmatpush1.msra.mxu0 %v40
  %415 = vmatprep.subr.mxu0 %v49
  %416 = vmatpush1.msra.mxu0 %v48
  %417 = vmatprep.subr.mxu0 %v57
  %418 = vmatpush1.msra.mxu0 %v56
  %419 = vmatprep.subr.mxu0 %v65
  %420 = vmatpush1.msra.mxu0 %v64
  %421 = vmatprep.subr.mxu0 %v73
  %422 = vmatpush1.msra.mxu0 %v72
  %423 = vmatprep.subr.mxu0 %v81
  %424 = vmatpush1.msra.mxu0 %v80
  %425 = vmatprep.subr.mxu0 %v89
  %426 = vmatpush1.msra.mxu0 %v88
  %427 = vmatprep.subr.mxu0 %v97
  %428 = vmatpush1.msra.mxu0 %v96
  %429 = vmatprep.subr.mxu0 %v105
  %430 = vmatpush1.msra.mxu0 %v104
  %431 = vmatprep.subr.mxu0 %v113
  %432 = vmatpush1.msra.mxu0 %v112
  %433 = vmatprep.subr.mxu0 %v121
  %434 = vmatpush1.msra.mxu0 %v120
  %435 = vmatprep.subr.mxu0 %v129
  %436 = vmatpush1.msra.mxu0 %v128
  %437 = vmatprep.subr.mxu0 %v137
  %438 = vmatpush1.msra.mxu0 %v136
  %439 = vmatprep.subr.mxu0 %v145
  %440 = vmatpush1.msra.mxu0 %v144
  %441 = vmatprep.subr.mxu0 %v153
  %442 = vmatpush1.msra.mxu0 %v152
  %443 = vmatprep.subr.mxu0 %v161
  %444 = vmatpush1.msra.mxu0 %v160
  %445 = vmatprep.subr.mxu0 %v169
  %446 = vmatpush1.msra.mxu0 %v168
  %447 = vmatprep.subr.mxu0 %v177
  %448 = vmatpush1.msra.mxu0 %v176
  %449 = vmatprep.subr.mxu0 %v185
  %450 = vmatpush1.msra.mxu0 %v184
  %451 = vmatprep.subr.mxu0 %v193
  %452 = vmatpush1.msra.mxu0 %v192
  %453 = vmatprep.subr.mxu0 %v201
  %454 = vmatpush1.msra.mxu0 %v200
  %455 = vmatprep.subr.mxu0 %v209
  %456 = vmatpush1.msra.mxu0 %v208
  %457 = vmatprep.subr.mxu0 %v217
  %458 = vmatpush1.msra.mxu0 %v216
  %459 = vmatprep.subr.mxu0 %v225
  %460 = vmatpush1.msra.mxu0 %v224
  %461 = vmatprep.subr.mxu0 %v233
  %462 = vmatpush1.msra.mxu0 %v232
  %463 = vmatprep.subr.mxu0 %v241
  %464 = vmatpush1.msra.mxu0 %v240
  %465 = vmatprep.subr.mxu0 %v249
  %466 = vmatpush1.msra.mxu0 %v248
  %467 = vmatprep.subr.mxu0 %v257
  %468 = vmatpush1.msra.mxu0 %v256
  %469 = vmatprep.subr.mxu0 %v265
  %470 = vmatpush1.msra.mxu0 %v264
  %471 = vmatprep.subr.mxu0 %v273
  %472 = vmatpush1.msra.mxu0 %v272
  %473 = vmatprep.mubr.f32.mxu0 %v15
  %474 = vmatmul.mubr.f32.gmra.mrb[0].mxu0 %v14
  %v475 = vpop.f32.mrb[0].mxu0
  %v476 = vadd.f32 %v291, %v475
  %v477 = vpop.f32.mrb[0].mxu0
  %v478 = vadd.f32 %v295, %v477
  %479 = vmatprep.mubr.f32.mxu0 %v17
  %480 = vmatmul.mubr.f32.gmra.mrb[0].mxu0 %v16
  %v481 = vpop.f32.mrb[0].mxu0
  %v482 = vadd.f32 %v291, %v481
  %v483 = vpop.f32.mrb[0].mxu0
  %v484 = vadd.f32 %v295, %v483
  %485 = vmatprep.mubr.f32.mxu0 %v19
  %486 = vmatmul.mubr.f32.gmra.mrb[0].mxu0 %v18
  %v487 = vpop.f32.mrb[0].mxu0
  %v488 = vadd.f32 %v291, %v487
  %v489 = vpop.f32.mrb[0].mxu0
  %v490 = vadd.f32 %v295, %v489
  %491 = vmatprep.mubr.f32.mxu0 %v21
  %492 = vmatmul.mubr.f32.gmra.mrb[0].mxu0 %v20
  %v493 = vpop.f32.mrb[0].mxu0
  %v494 = vadd.f32 %v291, %v493
  %v495 = vpop.f32.mrb[0].mxu0
  %v496 = vadd.f32 %v295, %v495
  %497 = vdwg.mxu0
  %498 = vmatprep.subr.mxu0 %v27
  %499 = vmatpush1.msra.mxu0 %v26
  %500 = vmatprep.subr.mxu0 %v35
  %501 = vmatpush1.msra.mxu0 %v34
  %502 = vmatprep.subr.mxu0 %v43
  %503 = vmatpush1.msra.mxu0 %v42
  %504 = vmatprep.subr.mxu0 %v51
  %505 = vmatpush1.msra.mxu0 %v50
  %506 = vmatprep.subr.mxu0 %v59
  %507 = vmatpush1.msra.mxu0 %v58
  %508 = vmatprep.subr.mxu0 %v67
  %509 = vmatpush1.msra.mxu0 %v66
  %510 = vmatprep.subr.mxu0 %v75
  %511 = vmatpush1.msra.mxu0 %v74
  %512 = vmatprep.subr.mxu0 %v83
  %513 = vmatpush1.msra.mxu0 %v82
  %514 = vmatprep.subr.mxu0 %v91
  %515 = vmatpush1.msra.mxu0 %v90
  %516 = vmatprep.subr.mxu0 %v99
  %517 = vmatpush1.msra.mxu0 %v98
  %518 = vmatprep.subr.mxu0 %v107
  %519 = vmatpush1.msra.mxu0 %v106
  %520 = vmatprep.subr.mxu0 %v115
  %521 = vmatpush1.msra.mxu0 %v114
  %522 = vmatprep.subr.mxu0 %v123
  %523 = vmatpush1.msra.mxu0 %v122
  %524 = vmatprep.subr.mxu0 %v131
  %525 = vmatpush1.msra.mxu0 %v130
  %526 = vmatprep.subr.mxu0 %v139
  %527 = vmatpush1.msra.mxu0 %v138
  %528 = vmatprep.subr.mxu0 %v147
  %529 = vmatpush1.msra.mxu0 %v146
  %530 = vmatprep.subr.mxu0 %v155
  %531 = vmatpush1.msra.mxu0 %v154
  %532 = vmatprep.subr.mxu0 %v163
  %533 = vmatpush1.msra.mxu0 %v162
  %534 = vmatprep.subr.mxu0 %v171
  %535 = vmatpush1.msra.mxu0 %v170
  %536 = vmatprep.subr.mxu0 %v179
  %537 = vmatpush1.msra.mxu0 %v178
  %538 = vmatprep.subr.mxu0 %v187
  %539 = vmatpush1.msra.mxu0 %v186
  %540 = vmatprep.subr.mxu0 %v195
  %541 = vmatpush1.msra.mxu0 %v194
  %542 = vmatprep.subr.mxu0 %v203
  %543 = vmatpush1.msra.mxu0 %v202
  %544 = vmatprep.subr.mxu0 %v211
  %545 = vmatpush1.msra.mxu0 %v210
  %546 = vmatprep.subr.mxu0 %v219
  %547 = vmatpush1.msra.mxu0 %v218
  %548 = vmatprep.subr.mxu0 %v227
  %549 = vmatpush1.msra.mxu0 %v226
  %550 = vmatprep.subr.mxu0 %v235
  %551 = vmatpush1.msra.mxu0 %v234
  %552 = vmatprep.subr.mxu0 %v243
  %553 = vmatpush1.msra.mxu0 %v242
  %554 = vmatprep.subr.mxu0 %v251
  %555 = vmatpush1.msra.mxu0 %v250
  %556 = vmatprep.subr.mxu0 %v259
  %557 = vmatpush1.msra.mxu0 %v258
  %558 = vmatprep.subr.mxu0 %v267
  %559 = vmatpush1.msra.mxu0 %v266
  %560 = vmatprep.subr.mxu0 %v275
  %561 = vmatpush1.msra.mxu0 %v274
  %562 = vmatprep.mubr.f32.mxu0 %v15
  %563 = vmatmul.mubr.f32.gmra.mrb[0].mxu0 %v14
  %v564 = vpop.f32.mrb[0].mxu0
  %v565 = vadd.f32 %v299, %v564
  %v566 = vpop.f32.mrb[0].mxu0
  %v567 = vadd.f32 %v303, %v566
  %568 = vmatprep.mubr.f32.mxu0 %v17
  %569 = vmatmul.mubr.f32.gmra.mrb[0].mxu0 %v16
  %v570 = vpop.f32.mrb[0].mxu0
  %v571 = vadd.f32 %v299, %v570
  %v572 = vpop.f32.mrb[0].mxu0
  %v573 = vadd.f32 %v303, %v572
  %574 = vmatprep.mubr.f32.mxu0 %v19
  %575 = vmatmul.mubr.f32.gmra.mrb[0].mxu0 %v18
  %v576 = vpop.f32.mrb[0].mxu0
  %v577 = vadd.f32 %v299, %v576
  %v578 = vpop.f32.mrb[0].mxu0
  %v579 = vadd.f32 %v303, %v578
  %580 = vmatprep.mubr.f32.mxu0 %v21
  %581 = vmatmul.mubr.f32.gmra.mrb[0].mxu0 %v20
  %v582 = vpop.f32.mrb[0].mxu0
  %v583 = vadd.f32 %v299, %v582
  %v584 = vpop.f32.mrb[0].mxu0
  %v585 = vadd.f32 %v303, %v584
  %586 = vdwg.mxu0
  %587 = vmatprep.subr.mxu0 %v29
  %588 = vmatpush1.msra.mxu0 %v28
  %589 = vmatprep.subr.mxu0 %v37
  %590 = vmatpush1.msra.mxu0 %v36
  %591 = vmatprep.subr.mxu0 %v45
  %592 = vmatpush1.msra.mxu0 %v44
  %593 = vmatprep.subr.mxu0 %v53
  %594 = vmatpush1.msra.mxu0 %v52
  %595 = vmatprep.subr.mxu0 %v61
  %596 = vmatpush1.msra.mxu0 %v60
  %597 = vmatprep.subr.mxu0 %v69
  %598 = vmatpush1.msra.mxu0 %v68
  %599 = vmatprep.subr.mxu0 %v77
  %600 = vmatpush1.msra.mxu0 %v76
  %601 = vmatprep.subr.mxu0 %v85
  %602 = vmatpush1.msra.mxu0 %v84
  %603 = vmatprep.subr.mxu0 %v93
  %604 = vmatpush1.msra.mxu0 %v92
  %605 = vmatprep.subr.mxu0 %v101
  %606 = vmatpush1.msra.mxu0 %v100
  %607 = vmatprep.subr.mxu0 %v109
  %608 = vmatpush1.msra.mxu0 %v108
  %609 = vmatprep.subr.mxu0 %v117
  %610 = vmatpush1.msra.mxu0 %v116
  %611 = vmatprep.subr.mxu0 %v125
  %612 = vmatpush1.msra.mxu0 %v124
  %613 = vmatprep.subr.mxu0 %v133
  %614 = vmatpush1.msra.mxu0 %v132
  %615 = vmatprep.subr.mxu0 %v141
  %616 = vmatpush1.msra.mxu0 %v140
  %617 = vmatprep.subr.mxu0 %v149
  %618 = vmatpush1.msra.mxu0 %v148
  %619 = vmatprep.subr.mxu0 %v157
  %620 = vmatpush1.msra.mxu0 %v156
  %621 = vmatprep.subr.mxu0 %v165
  %622 = vmatpush1.msra.mxu0 %v164
  %623 = vmatprep.subr.mxu0 %v173
  %624 = vmatpush1.msra.mxu0 %v172
  %625 = vmatprep.subr.mxu0 %v181
  %626 = vmatpush1.msra.mxu0 %v180
  %627 = vmatprep.subr.mxu0 %v189
  %628 = vmatpush1.msra.mxu0 %v188
  %629 = vmatprep.subr.mxu0 %v197
  %630 = vmatpush1.msra.mxu0 %v196
  %631 = vmatprep.subr.mxu0 %v205
  %632 = vmatpush1.msra.mxu0 %v204
  %633 = vmatprep.subr.mxu0 %v213
  %634 = vmatpush1.msra.mxu0 %v212
  %635 = vmatprep.subr.mxu0 %v221
  %636 = vmatpush1.msra.mxu0 %v220
  %637 = vmatprep.subr.mxu0 %v229
  %638 = vmatpush1.msra.mxu0 %v228
  %639 = vmatprep.subr.mxu0 %v237
  %640 = vmatpush1.msra.mxu0 %v236
  %641 = vmatprep.subr.mxu0 %v245
  %642 = vmatpush1.msra.mxu0 %v244
  %643 = vmatprep.subr.mxu0 %v253
  %644 = vmatpush1.msra.mxu0 %v252
  %645 = vmatprep.subr.mxu0 %v261
  %646 = vmatpush1.msra.mxu0 %v260
  %647 = vmatprep.subr.mxu0 %v269
  %648 = vmatpush1.msra.mxu0 %v268
  %649 = vmatprep.subr.mxu0 %v277
  %650 = vmatpush1.msra.mxu0 %v276
  %651 = vmatprep.mubr.f32.mxu0 %v15
  %652 = vmatmul.mubr.f32.gmra.mrb[0].mxu0 %v14
  %v653 = vpop.f32.mrb[0].mxu0
  %v654 = vadd.f32 %v307, %v653
  %v655 = vpop.f32.mrb[0].mxu0
  %v656 = vadd.f32 %v311, %v655
  %657 = vmatprep.mubr.f32.mxu0 %v17
  %658 = vmatmul.mubr.f32.gmra.mrb[0].mxu0 %v16
  %v659 = vpop.f32.mrb[0].mxu0
  %v660 = vadd.f32 %v307, %v659
  %v661 = vpop.f32.mrb[0].mxu0
  %v662 = vadd.f32 %v311, %v661
  %663 = vmatprep.mubr.f32.mxu0 %v19
  %664 = vmatmul.mubr.f32.gmra.mrb[0].mxu0 %v18
  %v665 = vpop.f32.mrb[0].mxu0
  %v666 = vadd.f32 %v307, %v665
  %v667 = vpop.f32.mrb[0].mxu0
  %v668 = vadd.f32 %v311, %v667
  %669 = vmatprep.mubr.f32.mxu0 %v21
  %670 = vmatmul.mubr.f32.gmra.mrb[0].mxu0 %v20
  %v671 = vpop.f32.mrb[0].mxu0
  %v672 = vadd.f32 %v307, %v671
  %v673 = vpop.f32.mrb[0].mxu0
  %v674 = vadd.f32 %v311, %v673
  %675 = vdwg.mxu0
  %676 = vst [vmem:[%s3] sm:$0xff] %v387
  %677 = vst [vmem:[%s3 + $0x8] sm:$0xff] %v389
  %678 = vst [vmem:[%s3 + $0x10] sm:$0xff] %v476
  %679 = vst [vmem:[%s3 + $0x18] sm:$0xff] %v478
  %680 = vst [vmem:[%s3 + $0x20] sm:$0xff] %v565
  %681 = vst [vmem:[%s3 + $0x28] sm:$0xff] %v567
  %682 = vst [vmem:[%s3 + $0x30] sm:$0xff] %v654
  %683 = vst [vmem:[%s3 + $0x38] sm:$0xff] %v656
  %684 = vst [vmem:[%s3 + $0x40] sm:$0xff] %v393
  %685 = vst [vmem:[%s3 + $0x48] sm:$0xff] %v395
  %686 = vst [vmem:[%s3 + $0x50] sm:$0xff] %v482
  %687 = vst [vmem:[%s3 + $0x58] sm:$0xff] %v484
  %688 = vst [vmem:[%s3 + $0x60] sm:$0xff] %v571
  %689 = vst [vmem:[%s3 + $0x68] sm:$0xff] %v573
  %690 = vst [vmem:[%s3 + $0x70] sm:$0xff] %v660
  %691 = vst [vmem:[%s3 + $0x78] sm:$0xff] %v662
  %692 = vst [vmem:[%s3 + $0x80] sm:$0xff] %v399
  %693 = vst [vmem:[%s3 + $0x88] sm:$0xff] %v401
  %694 = vst [vmem:[%s3 + $0x90] sm:$0xff] %v488
  %695 = vst [vmem:[%s3 + $0x98] sm:$0xff] %v490
  %696 = vst [vmem:[%s3 + $0xa0] sm:$0xff] %v577
  %697 = vst [vmem:[%s3 + $0xa8] sm:$0xff] %v579
  %698 = vst [vmem:[%s3 + $0xb0] sm:$0xff] %v666
  %699 = vst [vmem:[%s3 + $0xb8] sm:$0xff] %v668
  %700 = vst [vmem:[%s3 + $0xc0] sm:$0xff] %v405
  %701 = vst [vmem:[%s3 + $0xc8] sm:$0xff] %v407
  %702 = vst [vmem:[%s3 + $0xd0] sm:$0xff] %v494
  %703 = vst [vmem:[%s3 + $0xd8] sm:$0xff] %v496
  %704 = vst [vmem:[%s3 + $0xe0] sm:$0xff] %v583
  %705 = vst [vmem:[%s3 + $0xe8] sm:$0xff] %v585
  %706 = vst [vmem:[%s3 + $0xf0] sm:$0xff] %v672
  %707 = vst [vmem:[%s3 + $0xf8] sm:$0xff] %v674
  // Predicated region
  $region14: #{_lambda_.1} parent=0 // pred_check
    _
  $region15: #{_lambda_.1} parent=0 // pred_check_branch
    %709 = sbr.rel (0) target = $region17
  $region16: #{_lambda_.1} parent=0 // pred_region
    _
  $region17: #{_lambda_.1} parent=0 // pred_fallthru
    _
  // Predicated region
  $region18: #{_lambda_.1} parent=0 // pred_check
    _
  $region19: #{_lambda_.1} parent=0 // pred_check_branch
    %711 = sbr.rel (0) target = $region21
  $region20: #{_lambda_.1} parent=0 // pred_region
    _
  $region21: #{_lambda_.1} parent=0 // pred_fallthru
    _

</llo_original>
